<compile_context>
chip_gen: v5e
topology: v5e:2x2
jax: 0.10.0
libtpu: 0.0.40
codegen_flags: <defaults>
</compile_context>

<pallas_src>
import functools

import jax
import jax.numpy as jnp
from jax import lax
from jax.experimental import pallas as pl
from jax.experimental.pallas import tpu as pltpu


def _embed_add_kernel(ids_ref, tok_tbl_ref, pos_tbl_ref, out_ref, *, seq_len):
    """ids_ref:     (TILE_N, 1)  int32  token ids for this tile (TILE_N = TILE_B*T)
       tok_tbl_ref: (V, D)       float  full token-embedding table (VMEM-resident)
       pos_tbl_ref: (mxlen, D)   float  full positional table (VMEM-resident)
       out_ref:     (TILE_N, D)  float  tok[ids] + pos[arange(T)] (broadcast over batch)
    """
    tile_n = ids_ref.shape[0]
    vsz = tok_tbl_ref.shape[0]
    tile_b = tile_n // seq_len

    ids = ids_ref[...]                                            # (TILE_N, 1) int32
    # In-VMEM gather expressed as a one-hot MXU matmul (exactly one nonzero
    # per row -> numerically exact; out-of-range ids simply produce zeros).
    onehot = (ids == lax.broadcasted_iota(jnp.int32, (tile_n, vsz), 1)
              ).astype(tok_tbl_ref.dtype)                         # (TILE_N, V)
    tok = jnp.dot(onehot, tok_tbl_ref[...],
                  preferred_element_type=jnp.float32)             # (TILE_N, D) f32

    # Positions are arange(T): no gather needed, just the first T rows of the
    # resident table, repeated for every sequence in this tile.
    pos = pos_tbl_ref[0:seq_len, :].astype(jnp.float32)           # (T, D)
    pos = jnp.tile(pos, (tile_b, 1))                              # (TILE_N, D)

    # TODO(synk): train-mode dropout mask would be applied here.
    out_ref[...] = (tok + pos).astype(out_ref.dtype)


def learned_positional_embeddings(x, tok_table, pos_table, *, tile_b=None):
    """x: (B, T) int token ids.
       tok_table: (vsz, D) float32, row 0 is the padding row (zeros).
       pos_table: (mxlen, D) float32, row 0 is the padding row (zeros).
       returns: (B, T, D) float32 == Dropout.eval()(Emb(x) + PosEmb(arange(T)))."""
    B, T = x.shape
    V, D = tok_table.shape
    mxlen = pos_table.shape[0]
    assert T <= mxlen, "sequence longer than mxlen"

    # Sequences per grid step; each step handles tile_b * T tokens.
    if tile_b is None:
        tile_b = B
        while tile_b > 1 and tile_b * T > 1024:   # keep per-step tiles modest
            tile_b = (tile_b + 1) // 2
    while B % tile_b != 0:                        # simple index_map needs tile_b | B
        tile_b -= 1
    tile_n = tile_b * T
    N = B * T

    ids = x.reshape(N, 1).astype(jnp.int32)
    kernel = functools.partial(_embed_add_kernel, seq_len=T)

    out_flat = pl.pallas_call(
        kernel,
        out_shape=jax.ShapeDtypeStruct((N, D), tok_table.dtype),
        grid=(B // tile_b,),
        in_specs=[
            # token ids for this tile of sequences
            pl.BlockSpec((tile_n, 1), lambda i: (i, 0)),
            # whole token-embedding table, VMEM-resident (constant block)
            pl.BlockSpec((V, D), lambda i: (0, 0)),
            # whole positional table, VMEM-resident (constant block)
            pl.BlockSpec((mxlen, D), lambda i: (0, 0)),
        ],
        out_specs=pl.BlockSpec((tile_n, D), lambda i: (i, 0)),
        compiler_params=pltpu.CompilerParams(
            dimension_semantics=("parallel",)),
    )(ids, tok_table, pos_table)

    return out_flat.reshape(B, T, D)


if __name__ == "__main__":
    # Small, deterministic setup consistent with the module's __init__:
    #   vsz=50 vocabulary, dsz=32 hidden, mxlen=64, batch=2, seq=8
    B, T = 2, 8
    VSZ, DSZ, MXLEN = 50, 32, 64

    key = jax.random.PRNGKey(0)
    k_tok, k_pos, k_x = jax.random.split(key, 3)

    tok_table = jax.random.normal(k_tok, (VSZ, DSZ), dtype=jnp.float32)
    pos_table = jax.random.normal(k_pos, (MXLEN, DSZ), dtype=jnp.float32)
    # nn.Embedding(padding_idx=0) zeroes row 0 of the weight at init
    tok_table = tok_table.at[0].set(0.0)
    pos_table = pos_table.at[0].set(0.0)

    x = jax.random.randint(k_x, (B, T), minval=0, maxval=VSZ, dtype=jnp.int32)

    out = learned_positional_embeddings(x, tok_table, pos_table)
    out = jax.block_until_ready(out)

    # Pure-JAX reference for correctness
    ref = jnp.take(tok_table, x, axis=0) + jnp.take(
        pos_table, jnp.arange(T), axis=0)[None, :, :]
    assert out.shape == (B, T, DSZ)
    assert jnp.allclose(out, ref, atol=1e-5), "mismatch vs reference"

    print("KERNEL_OK")
</pallas_src>

<mosaic_0001>
module attributes {stable_mosaic.version = 11 : i64} {
  func.func @_embed_add_kernel(%arg0: i32, %arg1: memref<16x1xi32, #tpu.memory_space<vmem>>, %arg2: memref<50x32xf32, #tpu.memory_space<vmem>>, %arg3: memref<64x32xf32, #tpu.memory_space<vmem>>, %arg4: memref<16x32xf32, #tpu.memory_space<vmem>>) attributes {dimension_semantics = [#tpu.dimension_semantics<parallel>], iteration_bounds = array<i64: 1>, scalar_prefetch = 0 : i64, scratch_operands = 0 : i64, tpu.core_type = #tpu.core_type<tc>, window_params = [{transform_indices = @transform_0, window_bounds = array<i64: 16, 1>}, {pipeline_mode = #tpu.pipeline_mode<synchronous>, transform_indices = @transform_1, window_bounds = array<i64: 50, 32>}, {pipeline_mode = #tpu.pipeline_mode<synchronous>, transform_indices = @transform_2, window_bounds = array<i64: 64, 32>}, {transform_indices = @transform_3, window_bounds = array<i64: 16, 32>}]} {
    %c0 = arith.constant 0 : index
    %c0_0 = arith.constant 0 : index
    %0 = vector.load %arg1[%c0, %c0_0] : memref<16x1xi32, #tpu.memory_space<vmem>>, vector<16x1xi32>
    %1 = tpu.iota {dimensions = array<i32: 1>} : vector<16x50xi32>
    %2 = vector.broadcast %0 : vector<16x1xi32> to vector<16x50xi32>
    %3 = arith.cmpi eq, %2, %1 : vector<16x50xi32>
    %4 = arith.extui %3 : vector<16x50xi1> to vector<16x50xi32>
    %5 = arith.sitofp %4 : vector<16x50xi32> to vector<16x50xf32>
    %c0_1 = arith.constant 0 : index
    %c0_2 = arith.constant 0 : index
    %6 = vector.load %arg2[%c0_1, %c0_2] : memref<50x32xf32, #tpu.memory_space<vmem>>, vector<50x32xf32>
    %cst = arith.constant dense<0.000000e+00> : vector<16x32xf32>
    %7 = tpu.matmul %5, %6, %cst {dimension_numbers = #tpu.dot_dimension_numbers<[1], [0], [0], [1], [0, 0, 1, 1], [], []>} : vector<16x50xf32>, vector<50x32xf32>, vector<16x32xf32> -> vector<16x32xf32>
    %c0_3 = arith.constant 0 : index
    %c0_4 = arith.constant 0 : index
    %8 = vector.load %arg3[%c0_3, %c0_4] : memref<64x32xf32, #tpu.memory_space<vmem>>, vector<8x32xf32>
    %9 = tpu.concatenate %8, %8 in 0 : vector<8x32xf32>, vector<8x32xf32> -> vector<16x32xf32>
    %10 = arith.addf %7, %9 : vector<16x32xf32>
    %c0_5 = arith.constant 0 : index
    %c0_6 = arith.constant 0 : index
    %11 = vector.load %arg4[%c0_5, %c0_6] : memref<16x32xf32, #tpu.memory_space<vmem>>, vector<16x32xf32>
    tpu.vector_store %arg4[%c0_5, %c0_6], %10 {strides = array<i32>} : memref<16x32xf32, #tpu.memory_space<vmem>>, vector<16x32xf32>,
    return
  }
  func.func @transform_0(%arg0: i32) -> (i32, i32) {
    %c0_i32 = arith.constant 0 : i32
    %c0_i32_0 = arith.constant 0 : i32
    return %arg0, %c0_i32 : i32, i32
  }
  func.func @transform_1(%arg0: i32) -> (i32, i32) {
    %c0_i32 = arith.constant 0 : i32
    %c0_i32_0 = arith.constant 0 : i32
    %c0_i32_1 = arith.constant 0 : i32
    return %c0_i32, %c0_i32_0 : i32, i32
  }
  func.func @transform_2(%arg0: i32) -> (i32, i32) {
    %c0_i32 = arith.constant 0 : i32
    %c0_i32_0 = arith.constant 0 : i32
    %c0_i32_1 = arith.constant 0 : i32
    return %c0_i32, %c0_i32_0 : i32, i32
  }
  func.func @transform_3(%arg0: i32) -> (i32, i32) {
    %c0_i32 = arith.constant 0 : i32
    %c0_i32_0 = arith.constant 0 : i32
    return %arg0, %c0_i32 : i32, i32
  }
}

</mosaic_0001>

<llo_original>
// kernel: tpu_custom_call.1
$region0: #{tpu_custom_call.1}
  #allocation0 [shape = 'u32[]', space=smem, size = 0x4, offset = 0x4, fixed_abs, tag = 'smem constant byte address 0x4 - core index']
  #allocation1 [shape = 'u32[72,128]{1,0:T(1,128)}', space=vmem, size = 0x9000, scoped, tag = 'internal scratch']
  %s0 = inlined_call_operand.vmem [shape: s32[16,1], index: 0, kind: input, shape index: {}]
  %s1 = inlined_call_operand.vmem [shape: f32[50,32], index: 1, kind: input, shape index: {}]
  %s2 = inlined_call_operand.vmem [shape: f32[64,32], index: 2, kind: input, shape index: {}]
  %s3 = inlined_call_operand.hbm [shape: f32[16,32], index: 3, kind: output, shape index: {}]
  %s4 = sld [smem:[#allocation0]]
  $region22: #{tpu_custom_call.1} parent=0
    _
  %s6 = ssub.s32 1, %s4
  %s7 = scalar_select 0, %s6, %s4
  $region1: #{tpu_custom_call.1} parent=0
    #allocation2 [shape = 'u8[8192]{0}', space=vmem, size = 0x2000, scoped, tag = 'output window, operand 0, single buffered']
    #allocation3 [shape = 's32[1]{0}', space=sflag, size = 0x4, scoped, tag = 'scoped memory for tpu_custom_call.1']
    %8 = vsyncpa [#allocation3], 0
    // Predicated region
    $region2: #{tpu_custom_call.1} parent=1 // pred_check
      _
    $region3: #{tpu_custom_call.1} parent=1 // pred_check_branch
      %10 = sbr.rel (0) target = $region5
    $region4: #{tpu_custom_call.1} parent=1 // pred_region
      _
    $region5: #{tpu_custom_call.1} parent=1 // pred_fallthru
      _
    // Predicated region
    $region6: #{tpu_custom_call.1} parent=1 // pred_check
      _
    $region7: #{tpu_custom_call.1} parent=1 // pred_check_branch
      %12 = sbr.rel (0) target = $region9
    $region8: #{tpu_custom_call.1} parent=1 // pred_region
      _
    $region9: #{tpu_custom_call.1} parent=1 // pred_fallthru
      _
    // Predicated region
    $region10: #{tpu_custom_call.1} parent=1 // pred_check
      _
    $region11: #{tpu_custom_call.1} parent=1 // pred_check_branch
      %14 = sbr.rel (0) target = $region13
    $region12: #{tpu_custom_call.1} parent=1 // pred_region
      _
    $region13: #{tpu_custom_call.1} parent=1 // pred_fallthru
      _
    %v15 = vld [vmem:[%s0] sm:$0xff]
    %v16 = vld [vmem:[%s0 + $0x8] sm:$0xff]
    %v17 = vlaneseq
    %v18 = vand.u32 %v17, 127
    %19 = vset.pattern.permute.xlu0 0
    %20 = vperm.xlu0 %19, %v15
    %v21 = vpop.permute.xlu0 %20
    %22 = vset.pattern.permute.xlu0 0
    %23 = vperm.xlu0 %22, %v16
    %v24 = vpop.permute.xlu0 %23
    %vm25 = vcmp.eq.s32.totalorder %v21, %v18
    %vm26 = vcmp.eq.s32.totalorder %v24, %v18
    %v27 = vsel %vm25, 1, 0
    %v28 = vsel %vm26, 1, 0
    %v29 = vcvt.s32.f32 %v27
    %v30 = vcvt.s32.f32 %v28
    %v31 = vld [vmem:[%s1] sm:$0xff]
    %v32 = vld [vmem:[%s1 + $0x8] sm:$0xff]
    %v33 = vld [vmem:[%s1 + $0x10] sm:$0xff]
    %v34 = vld [vmem:[%s1 + $0x18] sm:$0xff]
    %v35 = vld [vmem:[%s1 + $0x20] sm:$0xff]
    %v36 = vld [vmem:[%s1 + $0x28] sm:$0xff]
    %v37 = vld [vmem:[%s1 + $0x30] sm:$0x3]
    %v38 = vld [vmem:[%s2] sm:$0xff]
    %vm39 = vcmask 408576
    %v41 = vsel %vm39, %v29, 0
    %v44 = vsel %vm39, %v30, 0
    %vm46 = vcmask 1041408
    %v48 = vsel %vm46, %v37, 0
    %50 = vmatpush.msra.mxu0 0.0
    %51 = vmatpush.msra.mxu0 0.0
    %52 = vmatpush.msra.mxu0 0.0
    %53 = vmatpush.msra.mxu0 0.0
    %54 = vmatpush.msra.mxu0 0.0
    %55 = vmatpush.msra.mxu0 0.0
    %56 = vmatpush.msra.mxu0 0.0
    %57 = vmatpush.msra.mxu0 0.0
    %58 = vmatpush.msra.mxu0 0.0
    %59 = vmatpush.msra.mxu0 %v48
    %60 = vmatpush.msra.mxu0 %v36
    %61 = vmatpush.msra.mxu0 %v35
    %62 = vmatpush.msra.mxu0 %v34
    %63 = vmatpush.msra.mxu0 %v33
    %64 = vmatpush.msra.mxu0 %v32
    %65 = vmatpush.msra.mxu0 %v31
    %66 = vmatmul.f32.gmra.mxu0 %v41
    %v67 = vpop.f32.mrf.mxu0
    %v68 = vadd.f32 %v38, %v67
    %69 = vmatmul.f32.gmra.mxu0 %v44
    %v70 = vpop.f32.mrf.mxu0
    %v71 = vadd.f32 %v38, %v70
    %72 = vdwg.mxu0
    %vm73 = vcmask 261120
    %74 = vst.msk [vmem:[#allocation2] sm:$0xff] %vm73, %v68
    %75 = vst.msk [vmem:[#allocation2 + $0x8] sm:$0xff] %vm73, %v71
    // Predicated region
    $region14: #{tpu_custom_call.1} parent=1 // pred_check
      _
    $region15: #{tpu_custom_call.1} parent=1 // pred_check_branch
      %77 = sbr.rel (0) target = $region17
    $region16: #{tpu_custom_call.1} parent=1 // pred_region
      %79 = vsyncadd [#allocation3], 0
      %s80 = sshll.u32 [#allocation2], 4
      %s81 = int_to_ptr.vmem [resolvable:$true] %s80
      %s82 = sshll.u32 %s3, 4
      %s83 = int_to_ptr.hbm [resolvable:$true] %s82
      %88 = dma.vmem_to_hbm [thread:$0]  %s81, 256, %s83, [#allocation3], 128, 128, 8
    $region17: #{tpu_custom_call.1} parent=1 // pred_fallthru
      _
    // Predicated region
    $region18: #{tpu_custom_call.1} parent=1 // pred_check
      _
    $region19: #{tpu_custom_call.1} parent=1 // pred_check_branch
      %90 = sbr.rel (0) target = $region21
    $region20: #{tpu_custom_call.1} parent=1 // pred_region
      %92 = dma.done [#allocation3], 256
    $region21: #{tpu_custom_call.1} parent=1 // pred_fallthru
      _
    %93 = vsyncpa [#allocation3], 1

</llo_original>
